<compile_context>
chip_gen: v7x
topology: tpu7x:2x2x1
jax: 0.10.0
libtpu: 0.0.40
codegen_flags: <defaults>
</compile_context>

<pallas_src>
import jax
import jax.numpy as jnp
from jax.experimental import pallas as pl
from jax.experimental.pallas import tpu as pltpu


_LANE_WIDTH = 512                      # lane-dense last dim (multiple of 128) -> unmasked vst
_TILE_BYTES_TARGET = 4 * 1024 * 1024   # ~4 MiB/block; in+out double-buffered = 16 MiB resident


def _linreg_kernel(w_ref, b_ref, x_ref, o_ref):
    # w_ref / b_ref are (1, 1) scalars in SMEM; x_ref / o_ref are VMEM tiles.
    w = w_ref[0, 0]
    b = b_ref[0, 0]
    o_ref[...] = w * x_ref[...] + b


def linear_regression_forward(x: jax.Array, weight: jax.Array, bias: jax.Array) -> jax.Array:
    """y = weight * x + bias with scalar weight/bias (shape (1,) like the nn.Parameters)."""
    orig_shape = x.shape
    x32 = x.astype(jnp.float32)
    total = x32.size

    # --- Present a lane-dense slab: flatten, pad to (rows, 512) with rows % 8 == 0.
    L = _LANE_WIDTH
    rows = pl.cdiv(total, L)
    rows = ((rows + 7) // 8) * 8
    padded = rows * L
    flat = jnp.pad(x32.reshape(-1), (0, padded - total))
    slab = flat.reshape(rows, L)

    # --- Largest row-tile within the per-block byte budget (multiple of 8 rows).
    target_rows = max(8, (_TILE_BYTES_TARGET // (L * 4)) // 8 * 8)   # 2048 for L=512
    tile_rows = min(rows, target_rows)
    grid = (pl.cdiv(rows, tile_rows),)   # trailing partial block is clamped by Pallas

    tile_bytes = tile_rows * L * 4
    # in + out, double-buffered, plus headroom for scalars/semaphores.
    vmem_limit = min(4 * tile_bytes + (4 << 20), 64 << 20)

    w2 = weight.reshape(1, 1).astype(jnp.float32)
    b2 = bias.reshape(1, 1).astype(jnp.float32)

    out = pl.pallas_call(
        _linreg_kernel,
        out_shape=jax.ShapeDtypeStruct((rows, L), jnp.float32),
        grid_spec=pltpu.PrefetchScalarGridSpec(
            num_scalar_prefetch=0,
            grid=grid,
            in_specs=[
                pl.BlockSpec(memory_space=pltpu.SMEM),            # weight scalar
                pl.BlockSpec(memory_space=pltpu.SMEM),            # bias scalar
                pl.BlockSpec((tile_rows, L), lambda i: (i, 0)),   # x tile
            ],
            out_specs=pl.BlockSpec((tile_rows, L), lambda i: (i, 0)),
        ),
        compiler_params=pltpu.CompilerParams(
            # single grid axis is independent per block -> sharded across v7x's 2 TCs
            dimension_semantics=("parallel",),
            vmem_limit_bytes=vmem_limit,
        ),
        cost_estimate=pl.CostEstimate(
            flops=2 * padded,                 # one mul + one add per element
            transcendentals=0,
            bytes_accessed=2 * padded * 4,    # read + write, f32
        ),
    )(w2, b2, slab)

    return out.reshape(-1)[:total].reshape(orig_shape)


if __name__ == "__main__":
    key = jax.random.PRNGKey(0)
    kx, kw, kb, kx2 = jax.random.split(key, 4)

    # Deterministic "parameters" matching nn.Parameter(torch.randn(1)) shapes.
    weight = jax.random.normal(kw, (1,), dtype=jnp.float32)
    bias = jax.random.normal(kb, (1,), dtype=jnp.float32)

    # Small input consistent with the module (elementwise; any shape works).
    x = jax.random.normal(kx, (32, 256), dtype=jnp.float32)
    y = jax.block_until_ready(linear_regression_forward(x, weight, bias))
    y_ref = weight[0] * x + bias[0]
    assert y.shape == x.shape
    assert jnp.allclose(y, y_ref, atol=1e-6, rtol=1e-6)

    # Ragged / non-lane-aligned shape exercises the flatten + pad + slice path.
    x2 = jax.random.normal(kx2, (5, 33), dtype=jnp.float32)
    y2 = jax.block_until_ready(linear_regression_forward(x2, weight, bias))
    assert jnp.allclose(y2, weight[0] * x2 + bias[0], atol=1e-6, rtol=1e-6)

    print("KERNEL_OK")
</pallas_src>

<mosaic_0001>
module attributes {stable_mosaic.version = 11 : i64} {
  func.func @_linreg_kernel(%arg0: i32, %arg1: memref<1x1xf32, #tpu.memory_space<smem>>, %arg2: memref<1x1xf32, #tpu.memory_space<smem>>, %arg3: memref<16x512xf32, #tpu.memory_space<vmem>>, %arg4: memref<16x512xf32, #tpu.memory_space<vmem>>) attributes {dimension_semantics = [#tpu.dimension_semantics<parallel>], iteration_bounds = array<i64: 1>, scalar_prefetch = 0 : i64, scratch_operands = 0 : i64, tpu.core_type = #tpu.core_type<tc>, window_params = [{transform_indices = @transform_0, window_bounds = array<i64: 1, 1>}, {transform_indices = @transform_1, window_bounds = array<i64: 1, 1>}, {transform_indices = @transform_2, window_bounds = array<i64: 16, 512>}, {transform_indices = @transform_3, window_bounds = array<i64: 16, 512>}]} {
    %c0 = arith.constant 0 : index
    %c0_0 = arith.constant 0 : index
    %0 = memref.load %arg1[%c0, %c0_0] : memref<1x1xf32, #tpu.memory_space<smem>>
    %c0_1 = arith.constant 0 : index
    %c0_2 = arith.constant 0 : index
    %1 = memref.load %arg2[%c0_1, %c0_2] : memref<1x1xf32, #tpu.memory_space<smem>>
    %c0_3 = arith.constant 0 : index
    %c0_4 = arith.constant 0 : index
    %2 = vector.load %arg3[%c0_3, %c0_4] : memref<16x512xf32, #tpu.memory_space<vmem>>, vector<16x512xf32>
    %3 = vector.broadcast %0 : f32 to vector<16x512xf32>
    %4 = arith.mulf %3, %2 : vector<16x512xf32>
    %5 = vector.broadcast %1 : f32 to vector<16x512xf32>
    %6 = arith.addf %4, %5 : vector<16x512xf32>
    %c0_5 = arith.constant 0 : index
    %c0_6 = arith.constant 0 : index
    %7 = vector.load %arg4[%c0_5, %c0_6] : memref<16x512xf32, #tpu.memory_space<vmem>>, vector<16x512xf32>
    tpu.vector_store %arg4[%c0_5, %c0_6], %6 {strides = array<i32>} : memref<16x512xf32, #tpu.memory_space<vmem>>, vector<16x512xf32>,
    return
  }
  func.func @transform_0(%arg0: i32) -> (i32, i32) {
    %c0_i32 = arith.constant 0 : i32
    %c0_i32_0 = arith.constant 0 : i32
    %c0_i32_1 = arith.constant 0 : i32
    return %c0_i32, %c0_i32_0 : i32, i32
  }
  func.func @transform_1(%arg0: i32) -> (i32, i32) {
    %c0_i32 = arith.constant 0 : i32
    %c0_i32_0 = arith.constant 0 : i32
    %c0_i32_1 = arith.constant 0 : i32
    return %c0_i32, %c0_i32_0 : i32, i32
  }
  func.func @transform_2(%arg0: i32) -> (i32, i32) {
    %c0_i32 = arith.constant 0 : i32
    %c0_i32_0 = arith.constant 0 : i32
    return %arg0, %c0_i32 : i32, i32
  }
  func.func @transform_3(%arg0: i32) -> (i32, i32) {
    %c0_i32 = arith.constant 0 : i32
    %c0_i32_0 = arith.constant 0 : i32
    return %arg0, %c0_i32 : i32, i32
  }
}

</mosaic_0001>

<llo_original>
// kernel: tpu_custom_call.1
$region0: #{tpu_custom_call.1}
  #allocation0 [shape = 'u32[]', space=smem, size = 0x4, offset = 0x4, fixed_abs, tag = 'smem constant byte address 0x4 - core index']
  #allocation1 [shape = 'u32[144,128]{1,0:T(1,128)}', space=vmem, size = 0x12000, scoped, tag = 'internal scratch']
  #allocation2 [shape = 'f32[1,1]{1,0:T(1,128)S(6)}', space=smem, size = 0x200, scoped, tag = 'scoped memory for tpu_custom_call.1']
  #allocation3 [shape = 'f32[1,1]{1,0:T(1,128)S(6)}', space=smem, size = 0x200, scoped, tag = 'scoped memory for tpu_custom_call.1']
  %s0 = inlined_call_operand.<no memory space> [shape: f32[1,1], index: 0, kind: input, shape index: {}]
  %s1 = inlined_call_operand.<no memory space> [shape: f32[1,1], index: 1, kind: input, shape index: {}]
  %s2 = inlined_call_operand.hbm [shape: f32[16,512], index: 2, kind: input, shape index: {}]
  %s3 = inlined_call_operand.hbm [shape: f32[16,512], index: 3, kind: output, shape index: {}]
  %s4 = sld [smem:[#allocation0]]
  $region26: #{tpu_custom_call.1} parent=0
    _
  %s6 = ssub.s32 1, %s4
  %s7 = scalar_select 0, %s6, %s4
  %8 = sst [smem:[#allocation2]] %s0
  %9 = sst [smem:[#allocation3]] %s1
  $region1: #{tpu_custom_call.1} parent=0
    #allocation4 [shape = 'u8[32768]{0}', space=vmem, size = 0x8000, scoped, tag = 'input window, operand 2, single buffered']
    #allocation5 [shape = 's32[1]{0}', space=sflag, size = 0x4, scoped, tag = 'scoped memory for tpu_custom_call.1']
    #allocation6 [shape = 's32[1]{0}', space=sflag, size = 0x4, scoped, tag = 'scoped memory for tpu_custom_call.1']
    #allocation7 [shape = 'u8[32768]{0}', space=vmem, size = 0x8000, scoped, tag = 'output window, operand 0, single buffered']
    %10 = vsyncpa [#allocation5], 0
    %11 = vsyncpa [#allocation6], 0
    // Predicated region
    $region2: #{tpu_custom_call.1} parent=1 // pred_check
      _
    $region3: #{tpu_custom_call.1} parent=1 // pred_check_branch
      %13 = sbr.rel (0) target = $region5
    $region4: #{tpu_custom_call.1} parent=1 // pred_region
      _
    $region5: #{tpu_custom_call.1} parent=1 // pred_fallthru
      _
    // Predicated region
    $region6: #{tpu_custom_call.1} parent=1 // pred_check
      _
    $region7: #{tpu_custom_call.1} parent=1 // pred_check_branch
      %15 = sbr.rel (0) target = $region9
    $region8: #{tpu_custom_call.1} parent=1 // pred_region
      _
    $region9: #{tpu_custom_call.1} parent=1 // pred_fallthru
      _
    // Predicated region
    $region10: #{tpu_custom_call.1} parent=1 // pred_check
      _
    $region11: #{tpu_custom_call.1} parent=1 // pred_check_branch
      %17 = sbr.rel (0) target = $region13
    $region12: #{tpu_custom_call.1} parent=1 // pred_region
      %s19 = ssub.s32 1024, 1024
      %20 = vsyncadd [#allocation5], %s19
      %s21 = sshll.u32 [#allocation4], 4
      %s22 = int_to_ptr.vmem [resolvable:$true] %s21
      %27 = dma.hbm_to_vmem [thread:$0]  %s2, 1024, %s22, [#allocation5], 512, 512, 32
    $region13: #{tpu_custom_call.1} parent=1 // pred_fallthru
      _
    // Predicated region
    $region14: #{tpu_custom_call.1} parent=1 // pred_check
      _
    $region15: #{tpu_custom_call.1} parent=1 // pred_check_branch
      %29 = sbr.rel (0) target = $region17
    $region16: #{tpu_custom_call.1} parent=1 // pred_region
      %30 = dma.done [#allocation5], 1024
    $region17: #{tpu_custom_call.1} parent=1 // pred_fallthru
      _
    %s31 = sld [smem:[#allocation2]]
    %s32 = sld [smem:[#allocation3]]
    %v33 = vld [vmem:[#allocation4] sm:$0xff]
    %v34 = vld [vmem:[#allocation4 + $0x8] sm:$0xff]
    %v35 = vld [vmem:[#allocation4 + $0x10] sm:$0xff]
    %v36 = vld [vmem:[#allocation4 + $0x18] sm:$0xff]
    %v37 = vld [vmem:[#allocation4 + $0x20] sm:$0xff]
    %v38 = vld [vmem:[#allocation4 + $0x28] sm:$0xff]
    %v39 = vld [vmem:[#allocation4 + $0x30] sm:$0xff]
    %v40 = vld [vmem:[#allocation4 + $0x38] sm:$0xff]
    %v41 = vstv %s31
    %v42 = vmul.f32 %v41, %v33
    %v43 = vmul.f32 %v41, %v34
    %v44 = vmul.f32 %v41, %v35
    %v45 = vmul.f32 %v41, %v36
    %v46 = vmul.f32 %v41, %v37
    %v47 = vmul.f32 %v41, %v38
    %v48 = vmul.f32 %v41, %v39
    %v49 = vmul.f32 %v41, %v40
    %v50 = vstv %s32
    %v51 = vadd.f32 %v42, %v50
    %v52 = vadd.f32 %v43, %v50
    %v53 = vadd.f32 %v44, %v50
    %v54 = vadd.f32 %v45, %v50
    %v55 = vadd.f32 %v46, %v50
    %v56 = vadd.f32 %v47, %v50
    %v57 = vadd.f32 %v48, %v50
    %v58 = vadd.f32 %v49, %v50
    %59 = vst [vmem:[#allocation7] sm:$0xff] %v51
    %60 = vst [vmem:[#allocation7 + $0x8] sm:$0xff] %v52
    %61 = vst [vmem:[#allocation7 + $0x10] sm:$0xff] %v53
    %62 = vst [vmem:[#allocation7 + $0x18] sm:$0xff] %v54
    %63 = vst [vmem:[#allocation7 + $0x20] sm:$0xff] %v55
    %64 = vst [vmem:[#allocation7 + $0x28] sm:$0xff] %v56
    %65 = vst [vmem:[#allocation7 + $0x30] sm:$0xff] %v57
    %66 = vst [vmem:[#allocation7 + $0x38] sm:$0xff] %v58
    // Predicated region
    $region18: #{tpu_custom_call.1} parent=1 // pred_check
      _
    $region19: #{tpu_custom_call.1} parent=1 // pred_check_branch
      %68 = sbr.rel (0) target = $region21
    $region20: #{tpu_custom_call.1} parent=1 // pred_region
      %s70 = ssub.s32 1024, 1024
      %71 = vsyncadd [#allocation6], %s70
      %s72 = sshll.u32 [#allocation7], 4
      %s73 = int_to_ptr.vmem [resolvable:$true] %s72
      %78 = dma.vmem_to_hbm [thread:$0]  %s73, 1024, %s3, [#allocation6], 512, 512, 32
    $region21: #{tpu_custom_call.1} parent=1 // pred_fallthru
      _
    // Predicated region
    $region22: #{tpu_custom_call.1} parent=1 // pred_check
      _
    $region23: #{tpu_custom_call.1} parent=1 // pred_check_branch
      %80 = sbr.rel (0) target = $region25
    $region24: #{tpu_custom_call.1} parent=1 // pred_region
      %81 = dma.done [#allocation6], 1024
    $region25: #{tpu_custom_call.1} parent=1 // pred_fallthru
      _
    %82 = vsyncpa [#allocation5], 1
    %83 = vsyncpa [#allocation6], 1

</llo_original>
